<compile_context>
chip_gen: v7x
topology: tpu7x:2x2x1
jax: 0.10.0
libtpu: 0.0.40
codegen_flags: <defaults>
</compile_context>

<pallas_src>
import jax
import jax.numpy as jnp
from jax.experimental import pallas as pl
from jax.experimental.pallas import tpu as pltpu

_LANE = 128
_SUBLANE = 8


def _round_up(a, b):
    return (a + b - 1) // b * b


def _pad_to(a, shape, dtype):
    a = a.astype(dtype)
    if tuple(a.shape) == tuple(shape):
        return a
    pads = [(0, s - d) for d, s in zip(a.shape, shape)]
    return jnp.pad(a, pads)


def _cvnet_kernel(tile_expert_ref,       # scalar-prefetch (SMEM), used by index_maps
                  tile_rows_ref,         # scalar-prefetch (SMEM), valid rows per tile
                  x_ref,                 # (TM, INP)            compute dtype
                  w1_ref, b1_ref,        # (1, INP, TH), (1, 1, TH)
                  w2_ref, b2_ref,        # (1, TH, OUTP), (1, 1, OUTP)
                  o_ref,                 # (TM, OUTP)           compute dtype
                  acc_ref):              # (TM, OUTP) f32 VMEM scratch
    del tile_expert_ref
    t = pl.program_id(0)
    k = pl.program_id(1)
    k_last = k == pl.num_programs(1) - 1
    rows = tile_rows_ref[t]

    @pl.when(k == 0)
    def _():
        acc_ref[...] = jnp.zeros_like(acc_ref)

    @pl.when(rows > 0)
    def _():
        x = x_ref[...]                                                   # (TM, INP)
        h = jnp.dot(x, w1_ref[0], preferred_element_type=jnp.float32)    # f32 accumulate
        h = jnp.maximum(h + b1_ref[0], 0.0)                              # bias + ReLU (f32)
        acc_ref[...] += jnp.dot(h.astype(w2_ref.dtype), w2_ref[0],
                                preferred_element_type=jnp.float32)

    @pl.when(jnp.logical_and(k_last, rows > 0))
    def _():
        o_ref[...] = jax.nn.sigmoid(acc_ref[...] + b2_ref[0]).astype(o_ref.dtype)

    @pl.when(jnp.logical_and(k_last, rows == 0))
    def _():
        o_ref[...] = jnp.zeros_like(o_ref)        # dead tile; rows never gathered


def cvnet_forward(x, num, c, params, *, tm=256, th=512,
                  compute_dtype=jnp.bfloat16):
    """x: [si, input] f32; num: [si] int; c: [num_classes] int (maps num -> expert).

    params: stacked expert weights
       w1: [E, input, hidden1], b1: [E, 1, hidden1]
       w2: [E, hidden1, output], b2: [E, 1, output]
    Returns [si, output] f32.
    """
    si, d_in = x.shape
    w1, b1, w2, b2 = params["w1"], params["b1"], params["w2"], params["b2"]
    E, _, h1 = w1.shape
    d_out = w2.shape[-1]

    # --- static tiling / padding geometry --------------------------------------
    tm = max(_SUBLANE, _round_up(min(tm, _round_up(si, _SUBLANE)), _SUBLANE))
    th = _round_up(min(th, _round_up(h1, _LANE)), _LANE)   # hidden chunk (lane multiple)
    h1p = _round_up(h1, th)                                 # multiple of th -> exact grid
    n_h1c = h1p // th
    d_inp = _round_up(d_in, _LANE)                          # lane-dense K for matmul 1
    d_outp = _round_up(d_out, _LANE)                        # lane-dense unmasked stores
    n_tiles = min(E, si) + pl.cdiv(si, tm)                  # static bound on row tiles
    n_rows = n_tiles * tm

    # --- routing + grouping by expert (plain JAX, feeds scalar prefetch) -------
    exp_idx = c[num].astype(jnp.int32)                       # [si]
    order = jnp.argsort(exp_idx)                             # sorted j -> original i
    sorted_exp = exp_idx[order]

    counts = jnp.zeros((E,), jnp.int32).at[exp_idx].add(1)   # samples per expert
    tiles_per_e = (counts + tm - 1) // tm
    cum_tiles = jnp.cumsum(tiles_per_e)
    tile_start = jnp.concatenate([jnp.zeros((1,), jnp.int32), cum_tiles[:-1]])
    row_start = tile_start * tm
    samp_start = jnp.concatenate(
        [jnp.zeros((1,), jnp.int32), jnp.cumsum(counts)[:-1]])
    pos_in_group = jnp.arange(si, dtype=jnp.int32) - samp_start[sorted_exp]
    dest_row = row_start[sorted_exp] + pos_in_group          # padded dest row per sorted sample

    tile_ids = jnp.arange(n_tiles, dtype=jnp.int32)
    total_tiles = cum_tiles[-1]
    is_live = tile_ids < total_tiles
    te_raw = jnp.searchsorted(cum_tiles, tile_ids, side="right").astype(jnp.int32)
    tile_expert = jnp.where(is_live, jnp.minimum(te_raw, E - 1), 0).astype(jnp.int32)
    local_tile = tile_ids - tile_start[tile_expert]
    tile_rows = jnp.where(
        is_live, jnp.clip(counts[tile_expert] - local_tile * tm, 0, tm), 0
    ).astype(jnp.int32)

    # --- pack inputs (K-padded, expert-grouped rows) ----------------------------
    x_sorted = _pad_to(x[order], (si, d_inp), compute_dtype)
    x_pad = jnp.zeros((n_rows, d_inp), compute_dtype).at[dest_row].set(x_sorted)

    w1p = _pad_to(w1, (E, d_inp, h1p), compute_dtype)   # zero K/H1 pads -> no effect
    b1p = _pad_to(b1, (E, 1, h1p), jnp.float32)
    w2p = _pad_to(w2, (E, h1p, d_outp), compute_dtype)  # zero padded hidden rows -> no effect
    b2p = _pad_to(b2, (E, 1, d_outp), jnp.float32)

    # --- cost estimate + VMEM budget --------------------------------------------
    cbytes = jnp.dtype(compute_dtype).itemsize
    flops = 2 * n_tiles * tm * (d_inp * h1p + h1p * d_outp)
    trans = n_tiles * tm * d_outp                         # exp() inside sigmoid
    bytes_acc = (n_rows * d_inp * cbytes
                 + E * (d_inp * h1p + h1p * d_outp) * cbytes
                 + E * (h1p + d_outp) * 4
                 + n_rows * d_outp * cbytes)
    cost = pl.CostEstimate(flops=int(flops), transcendentals=int(trans),
                           bytes_accessed=int(bytes_acc))

    per_step = (tm * d_inp * cbytes          # x tile
                + d_inp * th * cbytes        # W1 chunk
                + th * 4                     # b1 chunk
                + th * d_outp * cbytes       # W2 chunk
                + d_outp * 4                 # b2
                + tm * d_outp * cbytes)      # out tile
    vmem_needed = 2 * per_step + tm * d_outp * 4   # double-buffered blocks + f32 acc
    vmem_limit = int(max(vmem_needed * 5 // 4 + (2 << 20), 16 << 20))

    # --- pallas call -------------------------------------------------------------
    grid_spec = pltpu.PrefetchScalarGridSpec(
        num_scalar_prefetch=2,
        grid=(n_tiles, n_h1c),
        in_specs=[
            pl.BlockSpec((tm, d_inp),      lambda t, k, te, tr: (t, 0)),
            pl.BlockSpec((1, d_inp, th),   lambda t, k, te, tr: (te[t], 0, k)),
            pl.BlockSpec((1, 1, th),       lambda t, k, te, tr: (te[t], 0, k)),
            pl.BlockSpec((1, th, d_outp),  lambda t, k, te, tr: (te[t], k, 0)),
            pl.BlockSpec((1, 1, d_outp),   lambda t, k, te, tr: (te[t], 0, 0)),
        ],
        out_specs=pl.BlockSpec((tm, d_outp), lambda t, k, te, tr: (t, 0)),
        scratch_shapes=[pltpu.VMEM((tm, d_outp), jnp.float32)],
    )

    out = pl.pallas_call(
        _cvnet_kernel,
        out_shape=jax.ShapeDtypeStruct((n_rows, d_outp), compute_dtype),
        grid_spec=grid_spec,
        compiler_params=pltpu.CompilerParams(
            dimension_semantics=("parallel", "arbitrary"),   # row tiles || , H1 reduction
            vmem_limit_bytes=vmem_limit),
        cost_estimate=cost,
    )(tile_expert, tile_rows, x_pad, w1p, b1p, w2p, b2p)

    # --- gather back to original order, drop padding ----------------------------
    y_sorted = out[dest_row, :d_out].astype(jnp.float32)    # per sorted sample
    inv_order = jnp.argsort(order)                          # original i -> sorted pos
    return y_sorted[inv_order]


def init_params(key, num_classes, d_in, h1, d_out):
    ks = jax.random.split(key, 4)
    w1 = jax.random.uniform(ks[0], (num_classes, d_in, h1),
                            minval=-1.0, maxval=1.0, dtype=jnp.float32) / jnp.sqrt(d_in)
    b1 = jax.random.uniform(ks[1], (num_classes, 1, h1),
                            minval=-1.0, maxval=1.0, dtype=jnp.float32) / jnp.sqrt(d_in)
    w2 = jax.random.uniform(ks[2], (num_classes, h1, d_out),
                            minval=-1.0, maxval=1.0, dtype=jnp.float32) / jnp.sqrt(h1)
    b2 = jax.random.uniform(ks[3], (num_classes, 1, d_out),
                            minval=-1.0, maxval=1.0, dtype=jnp.float32) / jnp.sqrt(h1)
    return {"w1": w1, "b1": b1, "w2": w2, "b2": b2}


if __name__ == "__main__":
    key = jax.random.PRNGKey(0)
    k_x, k_num, k_c, k_p = jax.random.split(key, 4)

    si, d_in, h1, d_out, num_classes = 8, 32, 64, 16, 4

    x = jax.random.normal(k_x, (si, d_in), dtype=jnp.float32)
    num = jax.random.randint(k_num, (si,), 0, num_classes, dtype=jnp.int32)
    c = jax.random.randint(k_c, (num_classes,), 0, num_classes, dtype=jnp.int32)
    params = init_params(k_p, num_classes, d_in, h1, d_out)

    # plain-JAX reference
    exp_idx = c[num]
    h_ref = jnp.maximum(jnp.einsum("bi,bij->bj", x, params["w1"][exp_idx])
                        + params["b1"][exp_idx, 0], 0.0)
    y_ref = jax.nn.sigmoid(jnp.einsum("bh,bho->bo", h_ref, params["w2"][exp_idx])
                           + params["b2"][exp_idx, 0])

    # f32 compute path, tight numerical check
    y32 = cvnet_forward(x, num, c, params, compute_dtype=jnp.float32)
    jax.block_until_ready(y32)
    assert y32.shape == (si, d_out)
    assert jnp.allclose(y32, y_ref, atol=1e-5, rtol=1e-5)

    # default bf16 path (MXU-native on v5e/v6e/v7x), f32 accumulation + f32 epilogue
    y16 = cvnet_forward(x, num, c, params)
    jax.block_until_ready(y16)
    assert y16.shape == (si, d_out)
    assert jnp.allclose(y16, y_ref, atol=5e-2, rtol=0.0)

    print("KERNEL_OK")
</pallas_src>

<mosaic_0001>
module attributes {stable_mosaic.version = 11 : i64} {
  func.func @_cvnet_kernel(%arg0: i32, %arg1: i32, %arg2: memref<5xi32, #tpu.memory_space<smem>>, %arg3: memref<5xi32, #tpu.memory_space<smem>>, %arg4: memref<8x128xf32, #tpu.memory_space<vmem>>, %arg5: memref<1x128x128xf32, #tpu.memory_space<vmem>>, %arg6: memref<1x1x128xf32, #tpu.memory_space<vmem>>, %arg7: memref<1x128x128xf32, #tpu.memory_space<vmem>>, %arg8: memref<1x1x128xf32, #tpu.memory_space<vmem>>, %arg9: memref<8x128xf32, #tpu.memory_space<vmem>>, %arg10: memref<8x128xf32, #tpu.memory_space<vmem>>) attributes {dimension_semantics = [#tpu.dimension_semantics<parallel>, #tpu.dimension_semantics<arbitrary>], iteration_bounds = array<i64: 5, 1>, scalar_prefetch = 2 : i64, scratch_operands = 1 : i64, tpu.core_type = #tpu.core_type<tc>, window_params = [{transform_indices = @transform_0, window_bounds = array<i64: 8, 128>}, {transform_indices = @transform_1, window_bounds = array<i64: 1, 128, 128>}, {transform_indices = @transform_2, window_bounds = array<i64: 1, 1, 128>}, {transform_indices = @transform_3, window_bounds = array<i64: 1, 128, 128>}, {transform_indices = @transform_4, window_bounds = array<i64: 1, 1, 128>}, {transform_indices = @transform_5, window_bounds = array<i64: 8, 128>}]} {
    %c0_i32 = arith.constant 0 : i32
    %0 = arith.cmpi eq, %arg1, %c0_i32 : i32
    %1 = arith.index_cast %arg0 : i32 to index
    %2 = memref.load %arg3[%1] : memref<5xi32, #tpu.memory_space<smem>>
    %c0_i32_0 = arith.constant 0 : i32
    %3 = arith.cmpi eq, %arg1, %c0_i32_0 : i32
    %4 = arith.extui %3 : i1 to i32
    %c0_i32_1 = arith.constant 0 : i32
    %5 = arith.cmpi ne, %4, %c0_i32_1 : i32
    scf.if %5 {
      %cst = arith.constant 0.000000e+00 : f32
      %17 = vector.broadcast %cst : f32 to vector<8x128xf32>
      %c0 = arith.constant 0 : index
      %c0_8 = arith.constant 0 : index
      %18 = vector.load %arg10[%c0, %c0_8] : memref<8x128xf32, #tpu.memory_space<vmem>>, vector<8x128xf32>
      tpu.vector_store %arg10[%c0, %c0_8], %17 {strides = array<i32>} : memref<8x128xf32, #tpu.memory_space<vmem>>, vector<8x128xf32>,
    } else {
    }
    %c0_i32_2 = arith.constant 0 : i32
    %6 = arith.cmpi sgt, %2, %c0_i32_2 : i32
    %7 = arith.extui %6 : i1 to i32
    %c0_i32_3 = arith.constant 0 : i32
    %8 = arith.cmpi ne, %7, %c0_i32_3 : i32
    scf.if %8 {
      %c0 = arith.constant 0 : index
      %c0_8 = arith.constant 0 : index
      %17 = vector.load %arg4[%c0, %c0_8] : memref<8x128xf32, #tpu.memory_space<vmem>>, vector<8x128xf32>
      %c0_9 = arith.constant 0 : index
      %c0_10 = arith.constant 0 : index
      %c0_11 = arith.constant 0 : index
      %18 = vector.load %arg5[%c0_9, %c0_10, %c0_11] : memref<1x128x128xf32, #tpu.memory_space<vmem>>, vector<1x128x128xf32>
      %19 = vector.shape_cast %18 : vector<1x128x128xf32> to vector<128x128xf32>
      %cst = arith.constant dense<0.000000e+00> : vector<8x128xf32>
      %20 = tpu.matmul %17, %19, %cst {dimension_numbers = #tpu.dot_dimension_numbers<[1], [0], [0], [1], [0, 0, 1, 1], [], []>} : vector<8x128xf32>, vector<128x128xf32>, vector<8x128xf32> -> vector<8x128xf32>
      %c0_12 = arith.constant 0 : index
      %c0_13 = arith.constant 0 : index
      %c0_14 = arith.constant 0 : index
      %21 = vector.load %arg6[%c0_12, %c0_13, %c0_14] : memref<1x1x128xf32, #tpu.memory_space<vmem>>, vector<1x1x128xf32>
      %22 = vector.shape_cast %21 : vector<1x1x128xf32> to vector<1x128xf32>
      %23 = vector.broadcast %22 : vector<1x128xf32> to vector<8x128xf32>
      %24 = arith.addf %20, %23 : vector<8x128xf32>
      %cst_15 = arith.constant 0.000000e+00 : f32
      %25 = vector.broadcast %cst_15 : f32 to vector<8x128xf32>
      %26 = arith.maximumf %24, %25 : vector<8x128xf32>
      %c0_16 = arith.constant 0 : index
      %c0_17 = arith.constant 0 : index
      %27 = vector.load %arg10[%c0_16, %c0_17] : memref<8x128xf32, #tpu.memory_space<vmem>>, vector<8x128xf32>
      %c0_18 = arith.constant 0 : index
      %c0_19 = arith.constant 0 : index
      %c0_20 = arith.constant 0 : index
      %28 = vector.load %arg7[%c0_18, %c0_19, %c0_20] : memref<1x128x128xf32, #tpu.memory_space<vmem>>, vector<1x128x128xf32>
      %29 = vector.shape_cast %28 : vector<1x128x128xf32> to vector<128x128xf32>
      %cst_21 = arith.constant dense<0.000000e+00> : vector<8x128xf32>
      %30 = tpu.matmul %26, %29, %cst_21 {dimension_numbers = #tpu.dot_dimension_numbers<[1], [0], [0], [1], [0, 0, 1, 1], [], []>} : vector<8x128xf32>, vector<128x128xf32>, vector<8x128xf32> -> vector<8x128xf32>
      %31 = arith.addf %27, %30 : vector<8x128xf32>
      %c0_22 = arith.constant 0 : index
      %c0_23 = arith.constant 0 : index
      %32 = vector.load %arg10[%c0_22, %c0_23] : memref<8x128xf32, #tpu.memory_space<vmem>>, vector<8x128xf32>
      tpu.vector_store %arg10[%c0_22, %c0_23], %31 {strides = array<i32>} : memref<8x128xf32, #tpu.memory_space<vmem>>, vector<8x128xf32>,
    } else {
    }
    %c0_i32_4 = arith.constant 0 : i32
    %9 = arith.cmpi sgt, %2, %c0_i32_4 : i32
    %10 = arith.andi %0, %9 : i1
    %11 = arith.extui %10 : i1 to i32
    %c0_i32_5 = arith.constant 0 : i32
    %12 = arith.cmpi ne, %11, %c0_i32_5 : i32
    scf.if %12 {
      %c0 = arith.constant 0 : index
      %c0_8 = arith.constant 0 : index
      %17 = vector.load %arg10[%c0, %c0_8] : memref<8x128xf32, #tpu.memory_space<vmem>>, vector<8x128xf32>
      %c0_9 = arith.constant 0 : index
      %c0_10 = arith.constant 0 : index
      %c0_11 = arith.constant 0 : index
      %18 = vector.load %arg8[%c0_9, %c0_10, %c0_11] : memref<1x1x128xf32, #tpu.memory_space<vmem>>, vector<1x1x128xf32>
      %19 = vector.shape_cast %18 : vector<1x1x128xf32> to vector<1x128xf32>
      %20 = vector.broadcast %19 : vector<1x128xf32> to vector<8x128xf32>
      %21 = arith.addf %17, %20 : vector<8x128xf32>
      %22 = arith.negf %21 : vector<8x128xf32>
      %23 = math.exp %22 : vector<8x128xf32>
      %cst = arith.constant 1.000000e+00 : f32
      %24 = vector.broadcast %cst : f32 to vector<8x128xf32>
      %25 = arith.addf %24, %23 : vector<8x128xf32>
      %26 = arith.divf %24, %25 : vector<8x128xf32>
      %c0_12 = arith.constant 0 : index
      %c0_13 = arith.constant 0 : index
      %27 = vector.load %arg9[%c0_12, %c0_13] : memref<8x128xf32, #tpu.memory_space<vmem>>, vector<8x128xf32>
      tpu.vector_store %arg9[%c0_12, %c0_13], %26 {strides = array<i32>} : memref<8x128xf32, #tpu.memory_space<vmem>>, vector<8x128xf32>,
    } else {
    }
    %c0_i32_6 = arith.constant 0 : i32
    %13 = arith.cmpi eq, %2, %c0_i32_6 : i32
    %14 = arith.andi %0, %13 : i1
    %15 = arith.extui %14 : i1 to i32
    %c0_i32_7 = arith.constant 0 : i32
    %16 = arith.cmpi ne, %15, %c0_i32_7 : i32
    scf.if %16 {
      %cst = arith.constant 0.000000e+00 : f32
      %17 = vector.broadcast %cst : f32 to vector<8x128xf32>
      %c0 = arith.constant 0 : index
      %c0_8 = arith.constant 0 : index
      %18 = vector.load %arg9[%c0, %c0_8] : memref<8x128xf32, #tpu.memory_space<vmem>>, vector<8x128xf32>
      tpu.vector_store %arg9[%c0, %c0_8], %17 {strides = array<i32>} : memref<8x128xf32, #tpu.memory_space<vmem>>, vector<8x128xf32>,
    } else {
    }
    return
  }
  func.func @transform_0(%arg0: i32, %arg1: i32, %arg2: memref<5xi32, #tpu.memory_space<smem>>, %arg3: memref<5xi32, #tpu.memory_space<smem>>) -> (i32, i32) {
    %c0_i32 = arith.constant 0 : i32
    %c0_i32_0 = arith.constant 0 : i32
    return %arg0, %c0_i32 : i32, i32
  }
  func.func @transform_1(%arg0: i32, %arg1: i32, %arg2: memref<5xi32, #tpu.memory_space<smem>>, %arg3: memref<5xi32, #tpu.memory_space<smem>>) -> (i32, i32, i32) {
    %0 = arith.index_cast %arg0 : i32 to index
    %1 = memref.load %arg2[%0] : memref<5xi32, #tpu.memory_space<smem>>
    %c0_i32 = arith.constant 0 : i32
    %c0_i32_0 = arith.constant 0 : i32
    return %1, %c0_i32, %arg1 : i32, i32, i32
  }
  func.func @transform_2(%arg0: i32, %arg1: i32, %arg2: memref<5xi32, #tpu.memory_space<smem>>, %arg3: memref<5xi32, #tpu.memory_space<smem>>) -> (i32, i32, i32) {
    %0 = arith.index_cast %arg0 : i32 to index
    %1 = memref.load %arg2[%0] : memref<5xi32, #tpu.memory_space<smem>>
    %c0_i32 = arith.constant 0 : i32
    %c0_i32_0 = arith.constant 0 : i32
    return %1, %c0_i32, %arg1 : i32, i32, i32
  }
  func.func @transform_3(%arg0: i32, %arg1: i32, %arg2: memref<5xi32, #tpu.memory_space<smem>>, %arg3: memref<5xi32, #tpu.memory_space<smem>>) -> (i32, i32, i32) {
    %0 = arith.index_cast %arg0 : i32 to index
    %1 = memref.load %arg2[%0] : memref<5xi32, #tpu.memory_space<smem>>
    %c0_i32 = arith.constant 0 : i32
    %c0_i32_0 = arith.constant 0 : i32
    return %1, %arg1, %c0_i32 : i32, i32, i32
  }
  func.func @transform_4(%arg0: i32, %arg1: i32, %arg2: memref<5xi32, #tpu.memory_space<smem>>, %arg3: memref<5xi32, #tpu.memory_space<smem>>) -> (i32, i32, i32) {
    %0 = arith.index_cast %arg0 : i32 to index
    %1 = memref.load %arg2[%0] : memref<5xi32, #tpu.memory_space<smem>>
    %c0_i32 = arith.constant 0 : i32
    %c0_i32_0 = arith.constant 0 : i32
    %c0_i32_1 = arith.constant 0 : i32
    return %1, %c0_i32, %c0_i32_0 : i32, i32, i32
  }
  func.func @transform_5(%arg0: i32, %arg1: i32, %arg2: memref<5xi32, #tpu.memory_space<smem>>, %arg3: memref<5xi32, #tpu.memory_space<smem>>) -> (i32, i32) {
    %c0_i32 = arith.constant 0 : i32
    %c0_i32_0 = arith.constant 0 : i32
    return %arg0, %c0_i32 : i32, i32
  }
}

</mosaic_0001>

<llo_original>
// kernel: tpu_custom_call.1
$region0: #{tpu_custom_call.1}
  #allocation0 [shape = 'u32[]', space=smem, size = 0x4, offset = 0x4, fixed_abs, tag = 'smem constant byte address 0x4 - core index']
  #allocation1 [shape = 'u32[144,128]{1,0:T(1,128)}', space=vmem, size = 0x12000, scoped, tag = 'internal scratch']
  #allocation2 [shape = 'f32[8,128]{1,0:T(8,128)}', space=vmem, size = 0x1000, scoped, tag = 'scratch operand']
  #allocation3 [shape = 's32[1]{0}', space=sflag, size = 0x4, scoped, tag = 'scoped memory for tpu_custom_call.1']
  #allocation4 [shape = 'u8[512]{0}', space=smem, size = 0x200, scoped, tag = 'prefetched SMEM operand 0']
  #allocation5 [shape = 'u8[512]{0}', space=smem, size = 0x200, scoped, tag = 'prefetched SMEM operand 1']
  %s0 = inlined_call_operand.hbm [shape: s32[5], index: 0, kind: input, shape index: {}]
  %s1 = inlined_call_operand.vmem [shape: s32[5], index: 1, kind: input, shape index: {}]
  %s2 = inlined_call_operand.hbm [shape: f32[40,128], index: 2, kind: input, shape index: {}]
  %s3 = inlined_call_operand.hbm [shape: f32[4,128,128], index: 3, kind: input, shape index: {}]
  %s4 = inlined_call_operand.vmem [shape: f32[4,1,128], index: 4, kind: input, shape index: {}]
  %s5 = inlined_call_operand.hbm [shape: f32[4,128,128], index: 5, kind: input, shape index: {}]
  %s6 = inlined_call_operand.vmem [shape: f32[4,1,128], index: 6, kind: input, shape index: {}]
  %s7 = inlined_call_operand.hbm [shape: f32[40,128], index: 7, kind: output, shape index: {}]
  %s8 = sld [smem:[#allocation0]]
  $region81: #{tpu_custom_call.1} parent=0
    _
  %s10 = ssub.s32 1, %s8
  %s11 = scalar_select 0, %s10, %s8
  %13 = dma.hbm_to_smem %s0, 16, [#allocation4], [#allocation3]
  %s14 = sshll.u32 %s1, 4
  %s15 = int_to_ptr.vmem [resolvable:$true] %s14
  %17 = dma.vmem_to_smem %s15, 16, [#allocation5], [#allocation3]
  %18 = dma.done [#allocation3], 32
  %19 = sfence
  $region1: #{tpu_custom_call.1} parent=0
    #allocation6 [shape = 'u8[8192]{0}', space=vmem, size = 0x2000, scoped, tag = 'input window, operand 2']
    #allocation7 [shape = 's32[2]{0}', space=sflag, size = 0x8, scoped, tag = 'scoped memory for tpu_custom_call.1']
    #allocation8 [shape = 's32[2]{0}', space=sflag, size = 0x8, scoped, tag = 'scoped memory for tpu_custom_call.1']
    #allocation9 [shape = 'u8[131072]{0}', space=vmem, size = 0x20000, scoped, tag = 'input window, operand 3']
    #allocation10 [shape = 's32[2]{0}', space=sflag, size = 0x8, scoped, tag = 'scoped memory for tpu_custom_call.1']
    #allocation11 [shape = 'u8[131072]{0}', space=vmem, size = 0x20000, scoped, tag = 'input window, operand 5']
    #allocation12 [shape = 'u8[8192]{0}', space=vmem, size = 0x2000, scoped, tag = 'output window, operand 0']
    %20 = vsyncpa [#allocation7], 0
    %s21 = scalar_lea.sflag [#allocation7], 1
    %22 = vsyncpa %s21, 0
    %23 = vsyncpa [#allocation10], 0
    %s24 = scalar_lea.sflag [#allocation10], 1
    %25 = vsyncpa %s24, 0
    %26 = vsyncpa [#allocation8], 0
    %s27 = scalar_lea.sflag [#allocation8], 1
    %28 = vsyncpa %s27, 0
    loop: start=0, step=1, limit=7
    $region2: #{tpu_custom_call.1} parent=1 // loop_pre_header
      _
    $region3: #{tpu_custom_call.1} parent=1 // loop_header
      %s30 = sphi 0, %s34
      %p31 = scmp.ge.s32.totalorder %s30, 7
      %s37 = sphi 0, %s49
      %s38 = sphi 0, %s45
      %s39 = sphi 0, %s37
      %s40 = sphi 0, %s38
      %s41 = sphi 0, %s39
      %s42 = sphi 0, %s40
      %s52 = sphi 0, %s54
      %s55 = sphi 0, %s52
      %s56 = sphi 0, %s55
      %s72 = sphi 0, %s56
      %s82 = sphi 0, %s84
      %s85 = sphi 0, %s82
      %s86 = sphi 0, %s85
      %s102 = sphi 0, %s86
      %s112 = sphi 0, %s114
      %s115 = sphi 0, %s112
      %s116 = sphi 0, %s115
      %s132 = sphi 0, %s116
      %s142 = sphi 0, %s144
      %s145 = sphi 0, %s142
      %s146 = sphi 0, %s145
      %s162 = sphi 0, %s146
      %s170 = sphi 0, %s172
      %s173 = sphi 0, %s170
      %s174 = sphi 0, %s173
      %s190 = sphi 0, %s174
      %s196 = sphi 0, %s198
      %s199 = sphi 0, %s196
      %s200 = sphi 0, %s199
      %s216 = sphi 0, %s200
    $region4: #{tpu_custom_call.1} parent=1 // loop_header_branch
      %33 = sbr.rel (%p31) target = $region8
    $region5: #{tpu_custom_call.1} parent=1 // loop_body
      %s35 = ssub.s32 %s30, 1
      %s36 = ssub.s32 %s30, 2
      %s43 = sadd.s32 1, %s38
      %p44 = scmp.ge.s32.totalorder %s43, 1
      %s45 = scalar_select %p44, 0, %s43
      %s46 = sadd.s32 1, %s37
      %s47 = scalar_select %p44, %s46, %s37
      %p48 = scmp.ge.s32.totalorder %s47, 5
      %s49 = scalar_select %p48, 0, %s47
      %s50 = ssub.s32 %s37, %s49
      %p51 = scmp.eq.s32.totalorder %s50, 0
      %s53 = sadd.s32 %s52, 1
      %s54 = scalar_select %p51, %s52, %s53
      %p57 = pneg %p51
      %p58 = scmp.eq.s32.totalorder %s30, 4
      %p59 = por %p57, %p58
      %p60 = scmp.ne.s32.totalorder %s52, %s55
      %p61 = scmp.eq.s32.totalorder %s30, 0
      %p62 = por %p60, %p61
      %p63 = scmp.ne.s32.totalorder %s52, %s55
      %p64 = scmp.eq.s32.totalorder %s35, 4
      %p65 = por %p63, %p64
      %p66 = scmp.ne.s32.totalorder %s55, %s56
      %p67 = scmp.eq.s32.totalorder %s35, 0
      %p68 = por %p66, %p67
      %p69 = scmp.ne.s32.totalorder %s55, %s56
      %p70 = scmp.eq.s32.totalorder %s36, 4
      %p71 = por %p69, %p70
      %p73 = scmp.ne.s32.totalorder %s56, %s72
      %p74 = scmp.eq.s32.totalorder %s36, 0
      %p75 = por %p73, %p74
      %s76 = sld [smem:[#allocation4 + %s37]]
      %s77 = sld [smem:[#allocation4 + %s49]]
      %s78 = ssub.s32 %s76, %s77
      %s79 = ssub.s32 %s38, %s45
      %s80 = sor.u32 %s78, %s79
      %p81 = scmp.eq.s32.totalorder %s80, 0
      %s83 = sadd.s32 %s82, 1
      %s84 = scalar_select %p81, %s82, %s83
      %p87 = pneg %p81
      %p88 = scmp.eq.s32.totalorder %s30, 4
      %p89 = por %p87, %p88
      %p90 = scmp.ne.s32.totalorder %s82, %s85
      %p91 = scmp.eq.s32.totalorder %s30, 0
      %p92 = por %p90, %p91
      %p93 = scmp.ne.s32.totalorder %s82, %s85
      %p94 = scmp.eq.s32.totalorder %s35, 4
      %p95 = por %p93, %p94
      %p96 = scmp.ne.s32.totalorder %s85, %s86
      %p97 = scmp.eq.s32.totalorder %s35, 0
      %p98 = por %p96, %p97
      %p99 = scmp.ne.s32.totalorder %s85, %s86
      %p100 = scmp.eq.s32.totalorder %s36, 4
      %p101 = por %p99, %p100
      %p103 = scmp.ne.s32.totalorder %s86, %s102
      %p104 = scmp.eq.s32.totalorder %s36, 0
      %p105 = por %p103, %p104
      %s106 = sld [smem:[#allocation4 + %s37]]
      %s107 = sld [smem:[#allocation4 + %s49]]
      %s108 = ssub.s32 %s106, %s107
      %s109 = ssub.s32 %s38, %s45
      %s110 = sor.u32 %s108, %s109
      %p111 = scmp.eq.s32.totalorder %s110, 0
      %s113 = sadd.s32 %s112, 1
      %s114 = scalar_select %p111, %s112, %s113
      %p117 = pneg %p111
      %p118 = scmp.eq.s32.totalorder %s30, 4
      %p119 = por %p117, %p118
      %p120 = scmp.ne.s32.totalorder %s112, %s115
      %p121 = scmp.eq.s32.totalorder %s30, 0
      %p122 = por %p120, %p121
      %p123 = scmp.ne.s32.totalorder %s112, %s115
      %p124 = scmp.eq.s32.totalorder %s35, 4
      %p125 = por %p123, %p124
      %p126 = scmp.ne.s32.totalorder %s115, %s116
      %p127 = scmp.eq.s32.totalorder %s35, 0
      %p128 = por %p126, %p127
      %p129 = scmp.ne.s32.totalorder %s115, %s116
      %p130 = scmp.eq.s32.totalorder %s36, 4
      %p131 = por %p129, %p130
      %p133 = scmp.ne.s32.totalorder %s116, %s132
      %p134 = scmp.eq.s32.totalorder %s36, 0
      %p135 = por %p133, %p134
      %s136 = sld [smem:[#allocation4 + %s37]]
      %s137 = sld [smem:[#allocation4 + %s49]]
      %s138 = ssub.s32 %s136, %s137
      %s139 = ssub.s32 %s38, %s45
      %s140 = sor.u32 %s138, %s139
      %p141 = scmp.eq.s32.totalorder %s140, 0
      %s143 = sadd.s32 %s142, 1
      %s144 = scalar_select %p141, %s142, %s143
      %p147 = pneg %p141
      %p148 = scmp.eq.s32.totalorder %s30, 4
      %p149 = por %p147, %p148
      %p150 = scmp.ne.s32.totalorder %s142, %s145
      %p151 = scmp.eq.s32.totalorder %s30, 0
      %p152 = por %p150, %p151
      %p153 = scmp.ne.s32.totalorder %s142, %s145
      %p154 = scmp.eq.s32.totalorder %s35, 4
      %p155 = por %p153, %p154
      %p156 = scmp.ne.s32.totalorder %s145, %s146
      %p157 = scmp.eq.s32.totalorder %s35, 0
      %p158 = por %p156, %p157
      %p159 = scmp.ne.s32.totalorder %s145, %s146
      %p160 = scmp.eq.s32.totalorder %s36, 4
      %p161 = por %p159, %p160
      %p163 = scmp.ne.s32.totalorder %s146, %s162
      %p164 = scmp.eq.s32.totalorder %s36, 0
      %p165 = por %p163, %p164
      %s166 = sld [smem:[#allocation4 + %s37]]
      %s167 = sld [smem:[#allocation4 + %s49]]
      %s168 = ssub.s32 %s166, %s167
      %p169 = scmp.eq.s32.totalorder %s168, 0
      %s171 = sadd.s32 %s170, 1
      %s172 = scalar_select %p169, %s170, %s171
      %p175 = pneg %p169
      %p176 = scmp.eq.s32.totalorder %s30, 4
      %p177 = por %p175, %p176
      %p178 = scmp.ne.s32.totalorder %s170, %s173
      %p179 = scmp.eq.s32.totalorder %s30, 0
      %p180 = por %p178, %p179
      %p181 = scmp.ne.s32.totalorder %s170, %s173
      %p182 = scmp.eq.s32.totalorder %s35, 4
      %p183 = por %p181, %p182
      %p184 = scmp.ne.s32.totalorder %s173, %s174
      %p185 = scmp.eq.s32.totalorder %s35, 0
      %p186 = por %p184, %p185
      %p187 = scmp.ne.s32.totalorder %s173, %s174
      %p188 = scmp.eq.s32.totalorder %s36, 4
      %p189 = por %p187, %p188
      %p191 = scmp.ne.s32.totalorder %s174, %s190
      %p192 = scmp.eq.s32.totalorder %s36, 0
      %p193 = por %p191, %p192
      %s194 = ssub.s32 %s37, %s49
      %p195 = scmp.eq.s32.totalorder %s194, 0
      %s197 = sadd.s32 %s196, 1
      %s198 = scalar_select %p195, %s196, %s197
      %p201 = pneg %p195
      %p202 = scmp.eq.s32.totalorder %s30, 4
      %p203 = por %p201, %p202
      %p204 = scmp.ne.s32.totalorder %s196, %s199
      %p205 = scmp.eq.s32.totalorder %s30, 0
      %p206 = por %p204, %p205
      %p207 = scmp.ne.s32.totalorder %s196, %s199
      %p208 = scmp.eq.s32.totalorder %s35, 4
      %p209 = por %p207, %p208
      %p210 = scmp.ne.s32.totalorder %s199, %s200
      %p211 = scmp.eq.s32.totalorder %s35, 0
      %p212 = por %p210, %p211
      %p213 = scmp.ne.s32.totalorder %s199, %s200
      %p214 = scmp.eq.s32.totalorder %s36, 4
      %p215 = por %p213, %p214
      %p217 = scmp.ne.s32.totalorder %s200, %s216
      %p218 = scmp.eq.s32.totalorder %s36, 0
      %p219 = por %p217, %p218
      %p220 = scmp.le.s32.totalorder 1, %s30
      %p221 = scmp.lt.s32.totalorder %s30, 6
      %p222 = pnand %p220, %p221
      %p223 = pneg %p222
      // Predicated region
      $region9: #{tpu_custom_call.1} parent=5 // pred_check
        _
      $region10: #{tpu_custom_call.1} parent=5 // pred_check_branch
        %225 = sbr.rel (%p222) target = $region12
      $region11: #{tpu_custom_call.1} parent=5 // pred_region
        %s226 = ssub.s32 %s30, 1
      $region12: #{tpu_custom_call.1} parent=5 // pred_fallthru
        _
      %p227 = scmp.lt.s32.totalorder %s30, 5
      // Predicated region
      $region13: #{tpu_custom_call.1} parent=5 // pred_check
        %p228 = pneg %p227
      $region14: #{tpu_custom_call.1} parent=5 // pred_check_branch
        %230 = sbr.rel (%p228) target = $region16
      $region15: #{tpu_custom_call.1} parent=5 // pred_region
        // Predicated region
        $region17: #{tpu_custom_call.1} parent=15 // pred_check
          %p231 = pneg %p62
        $region18: #{tpu_custom_call.1} parent=15 // pred_check_branch
          %233 = sbr.rel (%p231) target = $region20
        $region19: #{tpu_custom_call.1} parent=15 // pred_region
          %s234 = sand.u32 %s52, 1
          %s235 = scalar_lea.sflag [#allocation7], %s234
          %s236 = sand.u32 %s52, 1
          %s237 = smul.addr %s236, 8
          %s238 = scalar_lea.vmem [#allocation6], %s237
          %s240 = ssub.s32 128, 128
          %241 = vsyncadd %s235, %s240
          %s242 = smul.addr %s37, 128
          %s243 = scalar_lea.hbm %s2, %s242
          %s245 = sshll.u32 %s238, 4
          %s246 = int_to_ptr.vmem [resolvable:$true] %s245
          %248 = dma.hbm_to_vmem [thread:$0]  %s243, 128, %s246, %s235
        $region20: #{tpu_custom_call.1} parent=15 // pred_fallthru
          _
        // Predicated region
        $region21: #{tpu_custom_call.1} parent=15 // pred_check
          %p249 = pneg %p92
        $region22: #{tpu_custom_call.1} parent=15 // pred_check_branch
          %251 = sbr.rel (%p249) target = $region24
        $region23: #{tpu_custom_call.1} parent=15 // pred_region
          %s252 = sand.u32 %s30, 1
          %s253 = scalar_lea.sflag [#allocation10], %s252
          %s254 = sand.u32 %s82, 1
          %s255 = smul.addr %s254, 128
          %s256 = scalar_lea.vmem [#allocation9], %s255
          %s257 = sld [smem:[#allocation4 + %s37]]
          %s259 = ssub.s32 2048, 2048
          %260 = vsyncadd %s253, %s259
          %s261 = smul.addr %s257, 16
          %s262 = sadd.s32 %s38, %s261
          %s263 = smul.addr %s262, 128
          %s264 = scalar_lea.hbm %s3, %s263
          %s265 = sshll.u32 %s256, 4
          %s266 = int_to_ptr.vmem [resolvable:$true] %s265
          %271 = dma.hbm_to_vmem [thread:$0]  %s264, 2048, %s266, %s253, 128, 128, 8
        $region24: #{tpu_custom_call.1} parent=15 // pred_fallthru
          _
        // Predicated region
        $region25: #{tpu_custom_call.1} parent=15 // pred_check
          %p272 = pneg %p122
        $region26: #{tpu_custom_call.1} parent=15 // pred_check_branch
          %274 = sbr.rel (%p272) target = $region28
        $region27: #{tpu_custom_call.1} parent=15 // pred_region
          %s275 = sld [smem:[#allocation4 + %s37]]
          %p276 = scmp.lt.s32.totalorder %s275, 3
          %s277 = scalar_select %p276, %s275, 3
          %p278 = scmp.lt.s32.totalorder %s38, 0
          %s279 = scalar_select %p278, %s38, 0
          %s280 = sadd.s32 %s279, %s277
          %s281 = scalar_lea.vmem %s4, %s280
          %s282 = sld [smem:[#allocation4 + %s37]]
        $region28: #{tpu_custom_call.1} parent=15 // pred_fallthru
          _
        // Predicated region
        $region29: #{tpu_custom_call.1} parent=15 // pred_check
          %p283 = pneg %p152
        $region30: #{tpu_custom_call.1} parent=15 // pred_check_branch
          %285 = sbr.rel (%p283) target = $region32
        $region31: #{tpu_custom_call.1} parent=15 // pred_region
          %s286 = sand.u32 %s30, 1
          %s287 = scalar_lea.sflag [#allocation10], %s286
          %s288 = sand.u32 %s142, 1
          %s289 = smul.addr %s288, 128
          %s290 = scalar_lea.vmem [#allocation11], %s289
          %s291 = sld [smem:[#allocation4 + %s37]]
          %s292 = smul.u32 16, %s38
          %s294 = ssub.s32 2048, 2048
          %295 = vsyncadd %s287, %s294
          %s296 = smul.addr %s291, 16
          %s297 = sadd.s32 %s292, %s296
          %s298 = smul.addr %s297, 128
          %s299 = scalar_lea.hbm %s5, %s298
          %s300 = sshll.u32 %s290, 4
          %s301 = int_to_ptr.vmem [resolvable:$true] %s300
          %306 = dma.hbm_to_vmem [thread:$0]  %s299, 2048, %s301, %s287, 128, 128, 8
        $region32: #{tpu_custom_call.1} parent=15 // pred_fallthru
          _
        // Predicated region
        $region33: #{tpu_custom_call.1} parent=15 // pred_check
          %p307 = pneg %p180
        $region34: #{tpu_custom_call.1} parent=15 // pred_check_branch
          %309 = sbr.rel (%p307) target = $region36
        $region35: #{tpu_custom_call.1} parent=15 // pred_region
          %s310 = sld [smem:[#allocation4 + %s37]]
          %p311 = scmp.lt.s32.totalorder %s310, 3
          %s312 = scalar_select %p311, %s310, 3
          %s313 = scalar_lea.vmem %s6, %s312
          %s314 = sld [smem:[#allocation4 + %s37]]
        $region36: #{tpu_custom_call.1} parent=15 // pred_fallthru
          _
      $region16: #{tpu_custom_call.1} parent=5 // pred_fallthru
        _
      %p315 = scmp.le.s32.totalorder 1, %s30
      %p316 = scmp.lt.s32.totalorder %s30, 6
      %p317 = pnand %p315, %p316
      %p318 = pneg %p317
      // Predicated region
      $region37: #{tpu_custom_call.1} parent=5 // pred_check
        _
      $region38: #{tpu_custom_call.1} parent=5 // pred_check_branch
        %320 = sbr.rel (%p317) target = $region40
      $region39: #{tpu_custom_call.1} parent=5 // pred_region
        %s321 = ssub.s32 %s30, 1
        %s322 = sand.u32 %s55, 1
        %s323 = scalar_lea.sflag [#allocation7], %s322
        %s324 = sand.u32 %s55, 1
        %s325 = smul.addr %s324, 8
        %s326 = scalar_lea.vmem [#allocation6], %s325
        // Predicated region
        $region41: #{tpu_custom_call.1} parent=39 // pred_check
          %p327 = pneg %p68
        $region42: #{tpu_custom_call.1} parent=39 // pred_check_branch
          %329 = sbr.rel (%p327) target = $region44
        $region43: #{tpu_custom_call.1} parent=39 // pred_region
          %330 = dma.done %s323, 128
        $region44: #{tpu_custom_call.1} parent=39 // pred_fallthru
          _
        %s331 = sand.u32 %s35, 1
        %s332 = scalar_lea.sflag [#allocation10], %s331
        %s333 = sand.u32 %s85, 1
        %s334 = smul.addr %s333, 128
        %s335 = scalar_lea.vmem [#allocation9], %s334
        // Predicated region
        $region45: #{tpu_custom_call.1} parent=39 // pred_check
          %p336 = pneg %p98
        $region46: #{tpu_custom_call.1} parent=39 // pred_check_branch
          %338 = sbr.rel (%p336) target = $region48
        $region47: #{tpu_custom_call.1} parent=39 // pred_region
          %339 = dma.done %s332, 2048
        $region48: #{tpu_custom_call.1} parent=39 // pred_fallthru
          _
        %s340 = sand.u32 %s35, 1
        %s341 = scalar_lea.sflag [#allocation10], %s340
        %s342 = sand.u32 %s145, 1
        %s343 = smul.addr %s342, 128
        %s344 = scalar_lea.vmem [#allocation11], %s343
        // Predicated region
        $region49: #{tpu_custom_call.1} parent=39 // pred_check
          %p345 = pneg %p158
        $region50: #{tpu_custom_call.1} parent=39 // pred_check_branch
          %347 = sbr.rel (%p345) target = $region52
        $region51: #{tpu_custom_call.1} parent=39 // pred_region
          %348 = dma.done %s341, 2048
        $region52: #{tpu_custom_call.1} parent=39 // pred_fallthru
          _
        %s349 = sand.u32 %s55, 1
        %s350 = scalar_lea.sflag [#allocation7], %s349
        %s351 = sand.u32 %s55, 1
        %s352 = smul.addr %s351, 8
        %s353 = scalar_lea.vmem [#allocation6], %s352
        %p354 = pneg %p68
        %p355 = pneg %p65
        %s356 = sand.u32 %s35, 1
        %s357 = scalar_lea.sflag [#allocation10], %s356
        %s358 = sand.u32 %s85, 1
        %s359 = smul.addr %s358, 128
        %s360 = scalar_lea.vmem [#allocation9], %s359
        %p361 = pneg %p98
        %p362 = pneg %p95
        %s363 = sld [smem:[#allocation4 + %s39]]
        %p364 = scmp.lt.s32.totalorder %s363, 3
        %s365 = scalar_select %p364, %s363, 3
        %p366 = scmp.lt.s32.totalorder %s40, 0
        %s367 = scalar_select %p366, %s40, 0
        %s368 = sadd.s32 %s367, %s365
        %s369 = scalar_lea.vmem %s4, %s368
        %p370 = pneg %p128
        %p371 = pneg %p125
        %s372 = sand.u32 %s35, 1
        %s373 = scalar_lea.sflag [#allocation10], %s372
        %s374 = sand.u32 %s145, 1
        %s375 = smul.addr %s374, 128
        %s376 = scalar_lea.vmem [#allocation11], %s375
        %p377 = pneg %p158
        %p378 = pneg %p155
        %s379 = sld [smem:[#allocation4 + %s39]]
        %p380 = scmp.lt.s32.totalorder %s379, 3
        %s381 = scalar_select %p380, %s379, 3
        %s382 = scalar_lea.vmem %s6, %s381
        %p383 = pneg %p186
        %p384 = pneg %p183
        %p385 = pneg %p212
        %p386 = pneg %p209
        %s387 = sand.u32 %s199, 1
        %s388 = scalar_lea.sflag [#allocation8], %s387
        %s389 = sand.u32 %s199, 1
        %s390 = smul.addr %s389, 8
        %s391 = scalar_lea.vmem [#allocation12], %s390
        %s392 = sld [smem:[#allocation4 + %s39]]
        %s393 = sld [smem:[#allocation4 + %s39]]
        %p394 = scmp.lt.s32.totalorder %s393, 3
        %s395 = scalar_select %p394, %s393, 3
        %p396 = scmp.lt.s32.totalorder %s40, 0
        %s397 = scalar_select %p396, %s40, 0
        %s398 = sadd.s32 %s397, %s395
        %s399 = scalar_lea.vmem %s4, %s398
        %s400 = sld [smem:[#allocation4 + %s39]]
        %s401 = sld [smem:[#allocation4 + %s39]]
        %s402 = smul.u32 16, %s40
        %s403 = sld [smem:[#allocation4 + %s39]]
        %p404 = scmp.lt.s32.totalorder %s403, 3
        %s405 = scalar_select %p404, %s403, 3
        %s406 = scalar_lea.vmem %s6, %s405
        %s407 = sld [smem:[#allocation4 + %s39]]
        %p408 = scmp.eq.s32.totalorder %s40, 0
        %s409 = sld [smem:[#allocation5 + %s39]]
        // Predicated region
        $region53: #{tpu_custom_call.1} parent=39 // pred_check
          %p410 = pneg %p408
        $region54: #{tpu_custom_call.1} parent=39 // pred_check_branch
          %412 = sbr.rel (%p410) target = $region56
        $region55: #{tpu_custom_call.1} parent=39 // pred_region
          %413 = vst [vmem:[#allocation2] sm:$0xff] 0.0
        $region56: #{tpu_custom_call.1} parent=39 // pred_fallthru
          _
        %p414 = scmp.gt.s32.totalorder %s409, 0
        // Predicated region
        $region57: #{tpu_custom_call.1} parent=39 // pred_check
          %p415 = pneg %p414
        $region58: #{tpu_custom_call.1} parent=39 // pred_check_branch
          %417 = sbr.rel (%p415) target = $region60
        $region59: #{tpu_custom_call.1} parent=39 // pred_region
          %v418 = vld [vmem:[%s326] sm:$0xff]
          %v419 = vld [vmem:[%s335] sm:$0xff]
          %v420 = vld [vmem:[%s335 + $0x8] sm:$0xff]
          %v421 = vld [vmem:[%s335 + $0x10] sm:$0xff]
          %v422 = vld [vmem:[%s335 + $0x18] sm:$0xff]
          %v423 = vld [vmem:[%s335 + $0x20] sm:$0xff]
          %v424 = vld [vmem:[%s335 + $0x28] sm:$0xff]
          %v425 = vld [vmem:[%s335 + $0x30] sm:$0xff]
          %v426 = vld [vmem:[%s335 + $0x38] sm:$0xff]
          %v427 = vld [vmem:[%s335 + $0x40] sm:$0xff]
          %v428 = vld [vmem:[%s335 + $0x48] sm:$0xff]
          %v429 = vld [vmem:[%s335 + $0x50] sm:$0xff]
          %v430 = vld [vmem:[%s335 + $0x58] sm:$0xff]
          %v431 = vld [vmem:[%s335 + $0x60] sm:$0xff]
          %v432 = vld [vmem:[%s335 + $0x68] sm:$0xff]
          %v433 = vld [vmem:[%s335 + $0x70] sm:$0xff]
          %v434 = vld [vmem:[%s335 + $0x78] sm:$0xff]
          %v435 = vld [vmem:[%s399] sm:$0x1]
          %v437 = vlaneseq
          %v438 = vshrl.u32 %v437, 7
          %v439 = vsub.s32 0, %v438
          %v440 = vrot.slane %v435, %v439
          %442 = vmatprep.subr.mxu0 0.0
          %443 = vmatpush1.msra.mxu0 %v419
          %444 = vmatprep.subr.mxu0 0.0
          %445 = vmatpush1.msra.mxu0 %v420
          %446 = vmatprep.subr.mxu0 0.0
          %447 = vmatpush1.msra.mxu0 %v421
          %448 = vmatprep.subr.mxu0 0.0
          %449 = vmatpush1.msra.mxu0 %v422
          %450 = vmatprep.subr.mxu0 0.0
          %451 = vmatpush1.msra.mxu0 %v423
          %452 = vmatprep.subr.mxu0 0.0
          %453 = vmatpush1.msra.mxu0 %v424
          %454 = vmatprep.subr.mxu0 0.0
          %455 = vmatpush1.msra.mxu0 %v425
          %456 = vmatprep.subr.mxu0 0.0
          %457 = vmatpush1.msra.mxu0 %v426
          %458 = vmatprep.subr.mxu0 0.0
          %459 = vmatpush1.msra.mxu0 %v427
          %460 = vmatprep.subr.mxu0 0.0
          %461 = vmatpush1.msra.mxu0 %v428
          %462 = vmatprep.subr.mxu0 0.0
          %463 = vmatpush1.msra.mxu0 %v429
          %464 = vmatprep.subr.mxu0 0.0
          %465 = vmatpush1.msra.mxu0 %v430
          %466 = vmatprep.subr.mxu0 0.0
          %467 = vmatpush1.msra.mxu0 %v431
          %468 = vmatprep.subr.mxu0 0.0
          %469 = vmatpush1.msra.mxu0 %v432
          %470 = vmatprep.subr.mxu0 0.0
          %471 = vmatpush1.msra.mxu0 %v433
          %472 = vmatprep.subr.mxu0 0.0
          %473 = vmatpush1.msra.mxu0 %v434
          %474 = vmatprep.subr.mxu0 0.0
          %475 = vmatpush1.msra.mxu0 0.0
          %476 = vmatprep.subr.mxu0 0.0
          %477 = vmatpush1.msra.mxu0 0.0
          %478 = vmatprep.subr.mxu0 0.0
          %479 = vmatpush1.msra.mxu0 0.0
          %480 = vmatprep.subr.mxu0 0.0
          %481 = vmatpush1.msra.mxu0 0.0
          %482 = vmatprep.subr.mxu0 0.0
          %483 = vmatpush1.msra.mxu0 0.0
          %484 = vmatprep.subr.mxu0 0.0
          %485 = vmatpush1.msra.mxu0 0.0
          %486 = vmatprep.subr.mxu0 0.0
          %487 = vmatpush1.msra.mxu0 0.0
          %488 = vmatprep.subr.mxu0 0.0
          %489 = vmatpush1.msra.mxu0 0.0
          %490 = vmatprep.subr.mxu0 0.0
          %491 = vmatpush1.msra.mxu0 0.0
          %492 = vmatprep.subr.mxu0 0.0
          %493 = vmatpush1.msra.mxu0 0.0
          %494 = vmatprep.subr.mxu0 0.0
          %495 = vmatpush1.msra.mxu0 0.0
          %496 = vmatprep.subr.mxu0 0.0
          %497 = vmatpush1.msra.mxu0 0.0
          %498 = vmatprep.subr.mxu0 0.0
          %499 = vmatpush1.msra.mxu0 0.0
          %500 = vmatprep.subr.mxu0 0.0
          %501 = vmatpush1.msra.mxu0 0.0
          %502 = vmatprep.subr.mxu0 0.0
          %503 = vmatpush1.msra.mxu0 0.0
          %504 = vmatprep.subr.mxu0 0.0
          %505 = vmatpush1.msra.mxu0 0.0
          %506 = vmatprep.mubr.f32.mxu0 0.0
          %507 = vmatmul.mubr.f32.gmra.mrb[0].mxu0 %v418
          %v508 = vpop.f32.mrb[0].mxu0
          %v509 = vadd.f32 %v440, %v508
          %v510 = vpop.f32.mrb[0].mxu0
          %511 = vdwg.mxu0
          %v512 = vmax.f32 %v509, 0.0
          %v513 = vld [vmem:[#allocation2] sm:$0xff]
          %v514 = vld [vmem:[%s344] sm:$0xff]
          %v515 = vld [vmem:[%s344 + $0x8] sm:$0xff]
          %v516 = vld [vmem:[%s344 + $0x10] sm:$0xff]
          %v517 = vld [vmem:[%s344 + $0x18] sm:$0xff]
          %v518 = vld [vmem:[%s344 + $0x20] sm:$0xff]
          %v519 = vld [vmem:[%s344 + $0x28] sm:$0xff]
          %v520 = vld [vmem:[%s344 + $0x30] sm:$0xff]
          %v521 = vld [vmem:[%s344 + $0x38] sm:$0xff]
          %v522 = vld [vmem:[%s344 + $0x40] sm:$0xff]
          %v523 = vld [vmem:[%s344 + $0x48] sm:$0xff]
          %v524 = vld [vmem:[%s344 + $0x50] sm:$0xff]
          %v525 = vld [vmem:[%s344 + $0x58] sm:$0xff]
          %v526 = vld [vmem:[%s344 + $0x60] sm:$0xff]
          %v527 = vld [vmem:[%s344 + $0x68] sm:$0xff]
          %v528 = vld [vmem:[%s344 + $0x70] sm:$0xff]
          %v529 = vld [vmem:[%s344 + $0x78] sm:$0xff]
          %530 = vmatprep.subr.mxu0 0.0
          %531 = vmatpush1.msra.mxu0 %v514
          %532 = vmatprep.subr.mxu0 0.0
          %533 = vmatpush1.msra.mxu0 %v515
          %534 = vmatprep.subr.mxu0 0.0
          %535 = vmatpush1.msra.mxu0 %v516
          %536 = vmatprep.subr.mxu0 0.0
          %537 = vmatpush1.msra.mxu0 %v517
          %538 = vmatprep.subr.mxu0 0.0
          %539 = vmatpush1.msra.mxu0 %v518
          %540 = vmatprep.subr.mxu0 0.0
          %541 = vmatpush1.msra.mxu0 %v519
          %542 = vmatprep.subr.mxu0 0.0
          %543 = vmatpush1.msra.mxu0 %v520
          %544 = vmatprep.subr.mxu0 0.0
          %545 = vmatpush1.msra.mxu0 %v521
          %546 = vmatprep.subr.mxu0 0.0
          %547 = vmatpush1.msra.mxu0 %v522
          %548 = vmatprep.subr.mxu0 0.0
          %549 = vmatpush1.msra.mxu0 %v523
          %550 = vmatprep.subr.mxu0 0.0
          %551 = vmatpush1.msra.mxu0 %v524
          %552 = vmatprep.subr.mxu0 0.0
          %553 = vmatpush1.msra.mxu0 %v525
          %554 = vmatprep.subr.mxu0 0.0
          %555 = vmatpush1.msra.mxu0 %v526
          %556 = vmatprep.subr.mxu0 0.0
          %557 = vmatpush1.msra.mxu0 %v527
          %558 = vmatprep.subr.mxu0 0.0
          %559 = vmatpush1.msra.mxu0 %v528
          %560 = vmatprep.subr.mxu0 0.0
          %561 = vmatpush1.msra.mxu0 %v529
          %562 = vmatprep.subr.mxu0 0.0
          %563 = vmatpush1.msra.mxu0 0.0
          %564 = vmatprep.subr.mxu0 0.0
          %565 = vmatpush1.msra.mxu0 0.0
          %566 = vmatprep.subr.mxu0 0.0
          %567 = vmatpush1.msra.mxu0 0.0
          %568 = vmatprep.subr.mxu0 0.0
          %569 = vmatpush1.msra.mxu0 0.0
          %570 = vmatprep.subr.mxu0 0.0
          %571 = vmatpush1.msra.mxu0 0.0
          %572 = vmatprep.subr.mxu0 0.0
          %573 = vmatpush1.msra.mxu0 0.0
          %574 = vmatprep.subr.mxu0 0.0
          %575 = vmatpush1.msra.mxu0 0.0
          %576 = vmatprep.subr.mxu0 0.0
          %577 = vmatpush1.msra.mxu0 0.0
          %578 = vmatprep.subr.mxu0 0.0
          %579 = vmatpush1.msra.mxu0 0.0
          %580 = vmatprep.subr.mxu0 0.0
          %581 = vmatpush1.msra.mxu0 0.0
          %582 = vmatprep.subr.mxu0 0.0
          %583 = vmatpush1.msra.mxu0 0.0
          %584 = vmatprep.subr.mxu0 0.0
          %585 = vmatpush1.msra.mxu0 0.0
          %586 = vmatprep.subr.mxu0 0.0
          %587 = vmatpush1.msra.mxu0 0.0
          %588 = vmatprep.subr.mxu0 0.0
          %589 = vmatpush1.msra.mxu0 0.0
          %590 = vmatprep.subr.mxu0 0.0
          %591 = vmatpush1.msra.mxu0 0.0
          %592 = vmatprep.subr.mxu0 0.0
          %593 = vmatpush1.msra.mxu0 0.0
          %594 = vmatprep.mubr.f32.mxu0 0.0
          %595 = vmatmul.mubr.f32.gmra.mrb[0].mxu0 %v512
          %v596 = vpop.f32.mrb[0].mxu0
          %v597 = vadd.f32 0.0, %v596
          %v598 = vpop.f32.mrb[0].mxu0
          %599 = vdwg.mxu0
          %v600 = vadd.f32 %v513, %v597
          %601 = vst [vmem:[#allocation2] sm:$0xff] %v600
        $region60: #{tpu_custom_call.1} parent=39 // pred_fallthru
          _
        %p602 = pnand %p408, %p414
        %p603 = pneg %p602
        // Predicated region
        $region61: #{tpu_custom_call.1} parent=39 // pred_check
          _
        $region62: #{tpu_custom_call.1} parent=39 // pred_check_branch
          %605 = sbr.rel (%p602) target = $region64
        $region63: #{tpu_custom_call.1} parent=39 // pred_region
          %v606 = vld [vmem:[#allocation2] sm:$0xff]
          %v607 = vld [vmem:[%s406] sm:$0x1]
          %v609 = vlaneseq
          %v610 = vshrl.u32 %v609, 7
          %v611 = vsub.s32 0, %v610
          %v612 = vrot.slane %v607, %v611
          %v614 = vadd.f32 %v606, %v612
          %v615 = vxor.u32 %v614, 2147483648
          %v616 = vmul.f32 %v615, 1.442695
          %v617 = vpow.pop %v616
          %v618 = vadd.f32 %v617, 1.0
          %v619 = vrcp.pop %v618
          %v620 = vmul.f32 1.0, %v619
          %621 = vst [vmem:[%s391] sm:$0xff] %v620
        $region64: #{tpu_custom_call.1} parent=39 // pred_fallthru
          _
        %p622 = scmp.eq.s32.totalorder %s409, 0
        %p623 = pnand %p408, %p622
        %p624 = pneg %p623
        // Predicated region
        $region65: #{tpu_custom_call.1} parent=39 // pred_check
          _
        $region66: #{tpu_custom_call.1} parent=39 // pred_check_branch
          %626 = sbr.rel (%p623) target = $region68
        $region67: #{tpu_custom_call.1} parent=39 // pred_region
          %627 = vst [vmem:[%s391] sm:$0xff] 0.0
        $region68: #{tpu_custom_call.1} parent=39 // pred_fallthru
          _
        %s628 = sand.u32 %s199, 1
        %s629 = scalar_lea.sflag [#allocation8], %s628
        %s630 = sand.u32 %s199, 1
        %s631 = smul.addr %s630, 8
        %s632 = scalar_lea.vmem [#allocation12], %s631
        // Predicated region
        $region69: #{tpu_custom_call.1} parent=39 // pred_check
          %p633 = pneg %p209
        $region70: #{tpu_custom_call.1} parent=39 // pred_check_branch
          %635 = sbr.rel (%p633) target = $region72
        $region71: #{tpu_custom_call.1} parent=39 // pred_region
          %s637 = ssub.s32 128, 128
          %638 = vsyncadd %s629, %s637
          %s639 = smul.addr %s39, 128
          %s640 = scalar_lea.hbm %s7, %s639
          %s642 = sshll.u32 %s632, 4
          %s643 = int_to_ptr.vmem [resolvable:$true] %s642
          %645 = dma.vmem_to_hbm [thread:$0]  %s643, 128, %s640, %s629
        $region72: #{tpu_custom_call.1} parent=39 // pred_fallthru
          _
      $region40: #{tpu_custom_call.1} parent=5 // pred_fallthru
        _
      %p646 = scmp.le.s32.totalorder 2, %s30
      // Predicated region
      $region73: #{tpu_custom_call.1} parent=5 // pred_check
        %p647 = pneg %p646
      $region74: #{tpu_custom_call.1} parent=5 // pred_check_branch
        %649 = sbr.rel (%p647) target = $region76
      $region75: #{tpu_custom_call.1} parent=5 // pred_region
        %s650 = ssub.s32 %s30, 2
        // Predicated region
        $region77: #{tpu_custom_call.1} parent=75 // pred_check
          %p651 = pneg %p215
        $region78: #{tpu_custom_call.1} parent=75 // pred_check_branch
          %653 = sbr.rel (%p651) target = $region80
        $region79: #{tpu_custom_call.1} parent=75 // pred_region
          %s654 = sand.u32 %s200, 1
          %s655 = scalar_lea.sflag [#allocation8], %s654
          %s656 = sand.u32 %s200, 1
          %s657 = smul.addr %s656, 8
          %s658 = scalar_lea.vmem [#allocation12], %s657
          %659 = dma.done %s655, 128
        $region80: #{tpu_custom_call.1} parent=75 // pred_fallthru
          _
      $region76: #{tpu_custom_call.1} parent=5 // pred_fallthru
        _
    $region6: #{tpu_custom_call.1} parent=1 // loop_footer
      %s34 = sadd.s32 1, %s30
    $region7: #{tpu_custom_call.1} parent=1 // loop_footer_branch
      %29 = sbr.rel target = $region3
    $region8: #{tpu_custom_call.1} parent=1 // loop_exit
      _
    %660 = vsyncpa [#allocation7], 1
    %s661 = scalar_lea.sflag [#allocation7], 1
    %662 = vsyncpa %s661, 1
    %663 = vsyncpa [#allocation10], 1
    %s664 = scalar_lea.sflag [#allocation10], 1
    %665 = vsyncpa %s664, 1
    %666 = vsyncpa [#allocation8], 1
    %s667 = scalar_lea.sflag [#allocation8], 1
    %668 = vsyncpa %s667, 1

</llo_original>
